<compile_context>
chip_gen: v6e
topology: v6e:2x2x1
jax: 0.10.0
libtpu: 0.0.40
codegen_flags: <defaults>
</compile_context>

<pallas_src>
import math

import jax
import jax.numpy as jnp
from jax.experimental import pallas as pl
from jax.experimental.pallas import tpu as pltpu


_VMEM_LIMIT_BYTES = 48 * 1024 * 1024    # safe on v5e/v6e (128 MiB) and v7x (64 MiB physical)
_BLOCK_BUDGET_BYTES = 4 * 1024 * 1024   # per-block target; ~6 live blocks => ~24 MiB


def _pe_add_kernel(x_ref, pe_ref, o_ref):
    # x_ref / pe_ref / o_ref are all (TS, LANE): batch dim squeezed by the
    # BlockSpec, so this is a pure shape-matched elementwise add.
    o_ref[...] = (x_ref[...] + pe_ref[...]).astype(o_ref.dtype)


def make_positional_encoding(d_model: int, max_len: int = 5000,
                             dtype=jnp.float32) -> jnp.ndarray:
    """Deterministic buffer init, identical to the PyTorch __init__.

    Pass the model dtype here (e.g. jnp.bfloat16) so the buffer never needs a
    per-call cast.
    """
    position = jnp.arange(max_len, dtype=jnp.float32)[:, None]            # (L, 1)
    div_term = jnp.exp(
        jnp.arange(0, d_model, 2, dtype=jnp.float32)
        * (-math.log(10000.0) / d_model)
    )                                                                     # (D/2,)
    pe = jnp.zeros((max_len, d_model), dtype=jnp.float32)
    pe = pe.at[:, 0::2].set(jnp.sin(position * div_term))
    pe = pe.at[:, 1::2].set(jnp.cos(position * div_term))
    return pe.astype(dtype)                                               # (L, D)


def _sublane_multiple(itemsize: int) -> int:
    # f32 -> 8 rows, bf16/f16 -> 16, int8/fp8 -> 32 (native packed tile height).
    return max(8, 32 // max(1, itemsize))


def _pick_tile_rows(n_rows: int, row_bytes: int, itemsize: int,
                    budget: int = _BLOCK_BUDGET_BYTES) -> int:
    """Row-tile: largest sublane-aligned count whose block fits the byte budget."""
    m = _sublane_multiple(itemsize)
    if n_rows <= m:
        return n_rows                      # full extent (always a legal block dim)
    ts = (budget // max(1, row_bytes)) // m * m
    ts = max(m, ts)
    if ts >= n_rows:
        return n_rows                      # single full-extent block
    return ts                              # multiple of m; last grid block is masked


def positional_encoding_forward(x: jnp.ndarray, pe: jnp.ndarray) -> jnp.ndarray:
    """x: [B, S, D], pe: [max_len, D] -> [B, S, D]"""
    B, S, D = x.shape
    assert pe.shape[0] >= S and pe.shape[1] == D
    itemsize = jnp.dtype(x.dtype).itemsize

    if D % 128 == 0 or (S * D) % 128 != 0:
        # Plain layout: [B, S, D] blocks. pe rows are addressed directly inside
        # the original [max_len, D] buffer via the index_map (no wrapper slice
        # unless a dtype cast is needed - and then only pe[:S] is cast).
        # TODO(synk): when D % 128 != 0 and S*D % 128 != 0 this path has
        # lane-masked stores; a padded-D layout could make it lane-dense.
        if pe.dtype != x.dtype:
            pe_in = pe[:S].astype(x.dtype)
        else:
            pe_in = pe
        x_in = x
        lane = D
        n_rows = S
        ts = _pick_tile_rows(S, D * itemsize, itemsize)
        needs_reshape_back = False
    else:
        # Lane-dense path for D % 128 != 0: flatten (S, D) -> (R, 128).
        # Contiguous reshape; the pe slice costs only S*D, not max_len*D.
        R = (S * D) // 128
        pe_in = pe[:S].astype(x.dtype).reshape(R, 128)
        x_in = x.reshape(B, R, 128)
        lane = 128
        n_rows = R
        ts = _pick_tile_rows(R, 128 * itemsize, itemsize)
        needs_reshape_back = True

    nrt = pl.cdiv(n_rows, ts)

    # Grid construction: batch innermost so the pe tile (index depends only on
    # the row-tile) stays resident in VMEM across the batch loop. Collapse to a
    # single parallel axis when one extent is 1 (better megacore split on v7x).
    if B == 1:
        grid = (nrt,)
        in_specs = [
            pl.BlockSpec((None, ts, lane), lambda s: (0, s, 0)),   # x
            pl.BlockSpec((ts, lane), lambda s: (s, 0)),            # pe
        ]
        out_spec = pl.BlockSpec((None, ts, lane), lambda s: (0, s, 0))
        dims = ("parallel",)
    elif nrt == 1:
        grid = (B,)
        in_specs = [
            pl.BlockSpec((None, ts, lane), lambda b: (b, 0, 0)),   # x
            pl.BlockSpec((ts, lane), lambda b: (0, 0)),            # pe (resident)
        ]
        out_spec = pl.BlockSpec((None, ts, lane), lambda b: (b, 0, 0))
        dims = ("parallel",)
    else:
        grid = (nrt, B)
        in_specs = [
            pl.BlockSpec((None, ts, lane), lambda s, b: (b, s, 0)),  # x
            pl.BlockSpec((ts, lane), lambda s, b: (s, 0)),           # pe (resident across b)
        ]
        out_spec = pl.BlockSpec((None, ts, lane), lambda s, b: (b, s, 0))
        dims = ("parallel", "parallel")

    out = pl.pallas_call(
        _pe_add_kernel,
        out_shape=jax.ShapeDtypeStruct((B, n_rows, lane), x.dtype),
        grid=grid,
        in_specs=in_specs,
        out_specs=out_spec,
        compiler_params=pltpu.CompilerParams(
            dimension_semantics=dims,
            vmem_limit_bytes=_VMEM_LIMIT_BYTES,
        ),
    )(x_in, pe_in)

    if needs_reshape_back:
        out = out.reshape(B, S, D)
    return out


if __name__ == "__main__":
    B, S, D = 2, 8, 32
    max_len = 64  # small synthetic max_len (>= S); same semantics as 5000

    key = jax.random.PRNGKey(0)
    x = jax.random.normal(key, (B, S, D), dtype=jnp.float32)

    pe = make_positional_encoding(D, max_len, dtype=x.dtype)

    out = positional_encoding_forward(x, pe)
    out = jax.block_until_ready(out)

    # correctness check against plain-JAX reference
    ref = x + pe[None, :S, :]
    assert out.shape == (B, S, D)
    assert out.dtype == x.dtype
    assert jnp.allclose(out, ref, atol=1e-6), "mismatch vs reference"

    print("KERNEL_OK")
</pallas_src>

<mosaic_0001>
module attributes {stable_mosaic.version = 11 : i64} {
  func.func @_pe_add_kernel(%arg0: i32, %arg1: memref<1x2x128xf32, #tpu.memory_space<vmem>>, %arg2: memref<2x128xf32, #tpu.memory_space<vmem>>, %arg3: memref<1x2x128xf32, #tpu.memory_space<vmem>>) attributes {dimension_semantics = [#tpu.dimension_semantics<parallel>], iteration_bounds = array<i64: 2>, scalar_prefetch = 0 : i64, scratch_operands = 0 : i64, tpu.core_type = #tpu.core_type<tc>, window_params = [{transform_indices = @transform_0, window_bounds = array<i64: 1, 2, 128>}, {pipeline_mode = #tpu.pipeline_mode<synchronous>, transform_indices = @transform_1, window_bounds = array<i64: 2, 128>}, {transform_indices = @transform_2, window_bounds = array<i64: 1, 2, 128>}]} {
    %c0 = arith.constant 0 : index
    %c0_0 = arith.constant 0 : index
    %c0_1 = arith.constant 0 : index
    %0 = vector.load %arg1[%c0, %c0_0, %c0_1] : memref<1x2x128xf32, #tpu.memory_space<vmem>>, vector<1x2x128xf32>
    %1 = vector.shape_cast %0 : vector<1x2x128xf32> to vector<2x128xf32>
    %c0_2 = arith.constant 0 : index
    %c0_3 = arith.constant 0 : index
    %2 = vector.load %arg2[%c0_2, %c0_3] : memref<2x128xf32, #tpu.memory_space<vmem>>, vector<2x128xf32>
    %3 = arith.addf %1, %2 : vector<2x128xf32>
    %c0_4 = arith.constant 0 : index
    %c0_5 = arith.constant 0 : index
    %c0_6 = arith.constant 0 : index
    %4 = vector.load %arg3[%c0_4, %c0_5, %c0_6] : memref<1x2x128xf32, #tpu.memory_space<vmem>>, vector<1x2x128xf32>
    %5 = vector.shape_cast %4 : vector<1x2x128xf32> to vector<2x128xf32>
    %6 = vector.shape_cast %3 : vector<2x128xf32> to vector<1x2x128xf32>
    tpu.vector_store %arg3[%c0_4, %c0_5, %c0_6], %6 {strides = array<i32>} : memref<1x2x128xf32, #tpu.memory_space<vmem>>, vector<1x2x128xf32>,
    return
  }
  func.func @transform_0(%arg0: i32) -> (i32, i32, i32) {
    %c0_i32 = arith.constant 0 : i32
    %c0_i32_0 = arith.constant 0 : i32
    %c0_i32_1 = arith.constant 0 : i32
    return %arg0, %c0_i32, %c0_i32_0 : i32, i32, i32
  }
  func.func @transform_1(%arg0: i32) -> (i32, i32) {
    %c0_i32 = arith.constant 0 : i32
    %c0_i32_0 = arith.constant 0 : i32
    %c0_i32_1 = arith.constant 0 : i32
    return %c0_i32, %c0_i32_0 : i32, i32
  }
  func.func @transform_2(%arg0: i32) -> (i32, i32, i32) {
    %c0_i32 = arith.constant 0 : i32
    %c0_i32_0 = arith.constant 0 : i32
    %c0_i32_1 = arith.constant 0 : i32
    return %arg0, %c0_i32, %c0_i32_0 : i32, i32, i32
  }
}

</mosaic_0001>

<llo_original>
// kernel: tpu_custom_call.1
$region0: #{tpu_custom_call.1}
  #allocation0 [shape = 'u32[]', space=smem, size = 0x4, offset = 0x4, fixed_abs, tag = 'smem constant byte address 0x4 - core index']
  #allocation1 [shape = 'u32[144,128]{1,0:T(1,128)}', space=vmem, size = 0x12000, scoped, tag = 'internal scratch']
  %s0 = inlined_call_operand.hbm [shape: f32[2,2,128], index: 0, kind: input, shape index: {}]
  %s1 = inlined_call_operand.hbm [shape: f32[2,128], index: 1, kind: input, shape index: {}]
  %s2 = inlined_call_operand.hbm [shape: f32[2,2,128], index: 2, kind: output, shape index: {}]
  %s3 = sld [smem:[#allocation0]]
  $region49: #{tpu_custom_call.1} parent=0
    _
  %s5 = ssub.s32 1, %s3
  %s6 = scalar_select 0, %s5, %s3
  $region1: #{tpu_custom_call.1} parent=0
    #allocation2 [shape = 'u8[2048]{0}', space=vmem, size = 0x800, scoped, tag = 'input window, operand 0']
    #allocation3 [shape = 's32[2]{0}', space=sflag, size = 0x8, scoped, tag = 'scoped memory for tpu_custom_call.1']
    #allocation4 [shape = 's32[2]{0}', space=sflag, size = 0x8, scoped, tag = 'scoped memory for tpu_custom_call.1']
    #allocation5 [shape = 'u8[1024]{0}', space=vmem, size = 0x400, scoped, tag = 'input window, operand 1, single buffered']
    #allocation6 [shape = 's32[1]{0}', space=sflag, size = 0x4, scoped, tag = 'scoped memory for tpu_custom_call.1']
    #allocation7 [shape = 'u8[2048]{0}', space=vmem, size = 0x800, scoped, tag = 'output window, operand 0']
    %7 = vsyncpa [#allocation3], 0
    %s8 = scalar_lea.sflag [#allocation3], 1
    %9 = vsyncpa %s8, 0
    %10 = vsyncpa [#allocation6], 0
    %11 = vsyncpa [#allocation4], 0
    %s12 = scalar_lea.sflag [#allocation4], 1
    %13 = vsyncpa %s12, 0
    loop: start=0, step=1, limit=4
    $region2: #{tpu_custom_call.1} parent=1 // loop_pre_header
      _
    $region3: #{tpu_custom_call.1} parent=1 // loop_header
      %s15 = sphi 0, %s19
      %p16 = scmp.ge.s32.totalorder %s15, 4
      %s25 = sphi 0, %s27
      %s28 = sphi 0, %s25
      %s29 = sphi 0, %s28
      %s45 = sphi 0, %s29
      %s49 = sphi 0, %s49
      %s51 = sphi 0, %s49
      %s52 = sphi 0, %s51
      %s66 = sphi 0, %s52
      %s72 = sphi 0, %s74
      %s75 = sphi 0, %s72
      %s76 = sphi 0, %s75
      %s92 = sphi 0, %s76
    $region4: #{tpu_custom_call.1} parent=1 // loop_header_branch
      %18 = sbr.rel (%p16) target = $region8
    $region5: #{tpu_custom_call.1} parent=1 // loop_body
      %s20 = ssub.s32 %s15, 1
      %s21 = ssub.s32 %s15, 2
      %s22 = sadd.s32 %s15, 1
      %s23 = ssub.s32 %s15, %s22
      %p24 = scmp.eq.s32.totalorder %s23, 0
      %s26 = sadd.s32 %s25, 1
      %s27 = scalar_select %p24, %s25, %s26
      %p30 = pneg %p24
      %p31 = scmp.eq.s32.totalorder %s15, 1
      %p32 = por %p30, %p31
      %p33 = scmp.ne.s32.totalorder %s25, %s28
      %p34 = scmp.eq.s32.totalorder %s15, 0
      %p35 = por %p33, %p34
      %p36 = scmp.ne.s32.totalorder %s25, %s28
      %p37 = scmp.eq.s32.totalorder %s20, 1
      %p38 = por %p36, %p37
      %p39 = scmp.ne.s32.totalorder %s28, %s29
      %p40 = scmp.eq.s32.totalorder %s20, 0
      %p41 = por %p39, %p40
      %p42 = scmp.ne.s32.totalorder %s28, %s29
      %p43 = scmp.eq.s32.totalorder %s21, 1
      %p44 = por %p42, %p43
      %p46 = scmp.ne.s32.totalorder %s29, %s45
      %p47 = scmp.eq.s32.totalorder %s21, 0
      %p48 = por %p46, %p47
      %s50 = sadd.s32 %s49, 1
      %p53 = scmp.eq.s32.totalorder %s15, 1
      %p54 = scmp.ne.s32.totalorder %s49, %s51
      %p55 = scmp.eq.s32.totalorder %s15, 0
      %p56 = por %p54, %p55
      %p57 = scmp.ne.s32.totalorder %s49, %s51
      %p58 = scmp.eq.s32.totalorder %s20, 1
      %p59 = por %p57, %p58
      %p60 = scmp.ne.s32.totalorder %s51, %s52
      %p61 = scmp.eq.s32.totalorder %s20, 0
      %p62 = por %p60, %p61
      %p63 = scmp.ne.s32.totalorder %s51, %s52
      %p64 = scmp.eq.s32.totalorder %s21, 1
      %p65 = por %p63, %p64
      %p67 = scmp.ne.s32.totalorder %s52, %s66
      %p68 = scmp.eq.s32.totalorder %s21, 0
      %p69 = por %p67, %p68
      %s70 = ssub.s32 %s15, %s22
      %p71 = scmp.eq.s32.totalorder %s70, 0
      %s73 = sadd.s32 %s72, 1
      %s74 = scalar_select %p71, %s72, %s73
      %p77 = pneg %p71
      %p78 = scmp.eq.s32.totalorder %s15, 1
      %p79 = por %p77, %p78
      %p80 = scmp.ne.s32.totalorder %s72, %s75
      %p81 = scmp.eq.s32.totalorder %s15, 0
      %p82 = por %p80, %p81
      %p83 = scmp.ne.s32.totalorder %s72, %s75
      %p84 = scmp.eq.s32.totalorder %s20, 1
      %p85 = por %p83, %p84
      %p86 = scmp.ne.s32.totalorder %s75, %s76
      %p87 = scmp.eq.s32.totalorder %s20, 0
      %p88 = por %p86, %p87
      %p89 = scmp.ne.s32.totalorder %s75, %s76
      %p90 = scmp.eq.s32.totalorder %s21, 1
      %p91 = por %p89, %p90
      %p93 = scmp.ne.s32.totalorder %s76, %s92
      %p94 = scmp.eq.s32.totalorder %s21, 0
      %p95 = por %p93, %p94
      %p96 = scmp.le.s32.totalorder 1, %s15
      %p97 = scmp.lt.s32.totalorder %s15, 3
      %p98 = pnand %p96, %p97
      %p99 = pneg %p98
      // Predicated region
      $region9: #{tpu_custom_call.1} parent=5 // pred_check
        _
      $region10: #{tpu_custom_call.1} parent=5 // pred_check_branch
        %101 = sbr.rel (%p98) target = $region12
      $region11: #{tpu_custom_call.1} parent=5 // pred_region
        %s102 = ssub.s32 %s15, 1
        // Predicated region
        $region13: #{tpu_custom_call.1} parent=11 // pred_check
          %p103 = pneg %p62
        $region14: #{tpu_custom_call.1} parent=11 // pred_check_branch
          %105 = sbr.rel (%p103) target = $region16
        $region15: #{tpu_custom_call.1} parent=11 // pred_region
          %s107 = ssub.s32 32, 32
          %108 = vsyncadd [#allocation6], %s107
          %s110 = sshll.u32 [#allocation5], 4
          %s111 = int_to_ptr.vmem [resolvable:$true] %s110
          %113 = dma.hbm_to_vmem [thread:$0]  %s1, 32, %s111, [#allocation6]
        $region16: #{tpu_custom_call.1} parent=11 // pred_fallthru
          _
      $region12: #{tpu_custom_call.1} parent=5 // pred_fallthru
        _
      %p114 = scmp.lt.s32.totalorder %s15, 2
      // Predicated region
      $region17: #{tpu_custom_call.1} parent=5 // pred_check
        %p115 = pneg %p114
      $region18: #{tpu_custom_call.1} parent=5 // pred_check_branch
        %117 = sbr.rel (%p115) target = $region20
      $region19: #{tpu_custom_call.1} parent=5 // pred_region
        // Predicated region
        $region21: #{tpu_custom_call.1} parent=19 // pred_check
          %p118 = pneg %p35
        $region22: #{tpu_custom_call.1} parent=19 // pred_check_branch
          %120 = sbr.rel (%p118) target = $region24
        $region23: #{tpu_custom_call.1} parent=19 // pred_region
          %s121 = sand.u32 %s25, 1
          %s122 = scalar_lea.sflag [#allocation3], %s121
          %s123 = sand.u32 %s25, 1
          %s124 = smul.addr %s123, 2
          %s125 = scalar_lea.vmem [#allocation2], %s124
          %s127 = ssub.s32 32, 32
          %128 = vsyncadd %s122, %s127
          %s129 = smul.addr %s15, 32
          %s130 = scalar_lea.hbm %s0, %s129
          %s132 = sshll.u32 %s125, 4
          %s133 = int_to_ptr.vmem [resolvable:$true] %s132
          %135 = dma.hbm_to_vmem [thread:$0]  %s130, 32, %s133, %s122
        $region24: #{tpu_custom_call.1} parent=19 // pred_fallthru
          _
      $region20: #{tpu_custom_call.1} parent=5 // pred_fallthru
        _
      %p136 = scmp.le.s32.totalorder 1, %s15
      %p137 = scmp.lt.s32.totalorder %s15, 3
      %p138 = pnand %p136, %p137
      %p139 = pneg %p138
      // Predicated region
      $region25: #{tpu_custom_call.1} parent=5 // pred_check
        _
      $region26: #{tpu_custom_call.1} parent=5 // pred_check_branch
        %141 = sbr.rel (%p138) target = $region28
      $region27: #{tpu_custom_call.1} parent=5 // pred_region
        %s142 = ssub.s32 %s15, 1
        %s143 = sand.u32 %s28, 1
        %s144 = scalar_lea.sflag [#allocation3], %s143
        %s145 = sand.u32 %s28, 1
        %s146 = smul.addr %s145, 2
        %s147 = scalar_lea.vmem [#allocation2], %s146
        // Predicated region
        $region29: #{tpu_custom_call.1} parent=27 // pred_check
          %p148 = pneg %p41
        $region30: #{tpu_custom_call.1} parent=27 // pred_check_branch
          %150 = sbr.rel (%p148) target = $region32
        $region31: #{tpu_custom_call.1} parent=27 // pred_region
          %151 = dma.done %s144, 32
        $region32: #{tpu_custom_call.1} parent=27 // pred_fallthru
          _
        // Predicated region
        $region33: #{tpu_custom_call.1} parent=27 // pred_check
          %p152 = pneg %p62
        $region34: #{tpu_custom_call.1} parent=27 // pred_check_branch
          %154 = sbr.rel (%p152) target = $region36
        $region35: #{tpu_custom_call.1} parent=27 // pred_region
          %155 = dma.done [#allocation6], 32
        $region36: #{tpu_custom_call.1} parent=27 // pred_fallthru
          _
        %s156 = sand.u32 %s28, 1
        %s157 = scalar_lea.sflag [#allocation3], %s156
        %s158 = sand.u32 %s28, 1
        %s159 = smul.addr %s158, 2
        %s160 = scalar_lea.vmem [#allocation2], %s159
        %p161 = pneg %p41
        %p162 = pneg %p38
        %p163 = pneg %p62
        %p164 = pneg %p59
        %p165 = pneg %p88
        %p166 = pneg %p85
        %s167 = sand.u32 %s75, 1
        %s168 = scalar_lea.sflag [#allocation4], %s167
        %s169 = sand.u32 %s75, 1
        %s170 = smul.addr %s169, 2
        %s171 = scalar_lea.vmem [#allocation7], %s170
        %v172 = vld [vmem:[%s147] sm:$0x3]
        %v173 = vld [vmem:[#allocation5] sm:$0x3]
        %v174 = vadd.f32 %v172, %v173
        %175 = vst [vmem:[%s171] sm:$0x3] %v174
        %s176 = sand.u32 %s75, 1
        %s177 = scalar_lea.sflag [#allocation4], %s176
        %s178 = sand.u32 %s75, 1
        %s179 = smul.addr %s178, 2
        %s180 = scalar_lea.vmem [#allocation7], %s179
        // Predicated region
        $region37: #{tpu_custom_call.1} parent=27 // pred_check
          %p181 = pneg %p85
        $region38: #{tpu_custom_call.1} parent=27 // pred_check_branch
          %183 = sbr.rel (%p181) target = $region40
        $region39: #{tpu_custom_call.1} parent=27 // pred_region
          %s185 = ssub.s32 32, 32
          %186 = vsyncadd %s177, %s185
          %s187 = smul.addr %s20, 32
          %s188 = scalar_lea.hbm %s2, %s187
          %s190 = sshll.u32 %s180, 4
          %s191 = int_to_ptr.vmem [resolvable:$true] %s190
          %193 = dma.vmem_to_hbm [thread:$0]  %s191, 32, %s188, %s177
        $region40: #{tpu_custom_call.1} parent=27 // pred_fallthru
          _
      $region28: #{tpu_custom_call.1} parent=5 // pred_fallthru
        _
      %p194 = scmp.le.s32.totalorder 2, %s15
      // Predicated region
      $region41: #{tpu_custom_call.1} parent=5 // pred_check
        %p195 = pneg %p194
      $region42: #{tpu_custom_call.1} parent=5 // pred_check_branch
        %197 = sbr.rel (%p195) target = $region44
      $region43: #{tpu_custom_call.1} parent=5 // pred_region
        %s198 = ssub.s32 %s15, 2
        // Predicated region
        $region45: #{tpu_custom_call.1} parent=43 // pred_check
          %p199 = pneg %p91
        $region46: #{tpu_custom_call.1} parent=43 // pred_check_branch
          %201 = sbr.rel (%p199) target = $region48
        $region47: #{tpu_custom_call.1} parent=43 // pred_region
          %s202 = sand.u32 %s76, 1
          %s203 = scalar_lea.sflag [#allocation4], %s202
          %s204 = sand.u32 %s76, 1
          %s205 = smul.addr %s204, 2
          %s206 = scalar_lea.vmem [#allocation7], %s205
          %207 = dma.done %s203, 32
        $region48: #{tpu_custom_call.1} parent=43 // pred_fallthru
          _
      $region44: #{tpu_custom_call.1} parent=5 // pred_fallthru
        _
    $region6: #{tpu_custom_call.1} parent=1 // loop_footer
      %s19 = sadd.s32 1, %s15
    $region7: #{tpu_custom_call.1} parent=1 // loop_footer_branch
      %14 = sbr.rel target = $region3
    $region8: #{tpu_custom_call.1} parent=1 // loop_exit
      _
    %208 = vsyncpa [#allocation3], 1
    %s209 = scalar_lea.sflag [#allocation3], 1
    %210 = vsyncpa %s209, 1
    %211 = vsyncpa [#allocation6], 1
    %212 = vsyncpa [#allocation4], 1
    %s213 = scalar_lea.sflag [#allocation4], 1
    %214 = vsyncpa %s213, 1

</llo_original>
